<compile_context>
chip_gen: v7x
topology: tpu7x:2x2x1
jax: 0.10.0
libtpu: 0.0.40
codegen_flags: <defaults>
</compile_context>

<pallas_src>
import functools

import jax
import jax.numpy as jnp
from jax.experimental import pallas as pl
from jax.experimental.pallas import tpu as pltpu

LANE = 128
SUBLANE = 8


def _round_up(x, m):
    return ((x + m - 1) // m) * m


def _pad2d(x, rows, cols):
    pr, pc = rows - x.shape[0], cols - x.shape[1]
    if pr == 0 and pc == 0:
        return x
    return jnp.pad(x, ((0, pr), (0, pc)))


def init_decoder_params(key, code_size, output_size, hidden_sizes=()):
    """nn.Linear-style init; weights stored transposed as (in_features, out_features)."""
    layer_sizes = list(hidden_sizes) + [output_size]
    params = []
    prev = code_size
    for out_dim in layer_sizes:
        key, kw, kb = jax.random.split(key, 3)
        bound = 1.0 / (prev ** 0.5)
        w = jax.random.uniform(kw, (prev, out_dim), jnp.float32, -bound, bound)
        b = jax.random.uniform(kb, (out_dim,), jnp.float32, -bound, bound)
        params.append((w, b))
        prev = out_dim
    return params


def prepare_decoder_params(params, compute_dtype=jnp.float32):
    """Zero-pad every layer to lane-dense (multiple-of-128) shapes and cast to the MXU
    compute dtype. Done once at init time, not per forward call."""
    padded = []
    for w, b in params:
        kin, kout = w.shape
        kin_p, kout_p = _round_up(kin, LANE), _round_up(kout, LANE)
        wp = _pad2d(w, kin_p, kout_p).astype(compute_dtype)
        bp = jnp.pad(b, (0, kout_p - kout)).reshape(1, kout_p).astype(compute_dtype)
        padded.append((wp, bp))
    return padded


def _fused_decoder_kernel(*refs):
    """refs = (x_ref, w0, b0, w1, b1, ..., o_ref).

    One batch tile of the entire decoder. The layer loop is a static Python unroll
    (layer count / shapes are compile-time constants); intermediates stay on-chip."""
    x_ref, o_ref = refs[0], refs[-1]
    param_refs = refs[1:-1]
    n_layers = len(param_refs) // 2

    x = x_ref[...].astype(jnp.float32)
    for l in range(n_layers):
        w = param_refs[2 * l][...]
        b = param_refs[2 * l + 1][...]          # (1, N) — implicit broadcast over rows
        acc = jnp.dot(x.astype(w.dtype), w, preferred_element_type=jnp.float32)  # MXU
        acc = acc + b.astype(jnp.float32)
        x = jnp.maximum(acc, 0.0)               # ReLU on the VPU, kept in f32
    o_ref[...] = x.astype(o_ref.dtype)


@functools.partial(jax.jit, static_argnames=("output_size", "tm"))
def decoder_forward(code, padded_params, *, output_size, tm=None):
    """Fused Decoder forward: a single pallas_call over batch tiles."""
    M, _ = code.shape
    k0_p = padded_params[0][0].shape[0]
    n_last = padded_params[-1][0].shape[1]

    # Batch tile: whole (8-rounded) batch when small; 512-row tiles otherwise so the
    # grid pipelines and (on v7x) has >=2 parallel steps to feed both TensorCores.
    if tm is None:
        tm = min(_round_up(M, SUBLANE), 512)
    m_p = _round_up(M, tm)

    x_p = _pad2d(code.astype(jnp.float32), m_p, k0_p)

    in_specs = [pl.BlockSpec((tm, k0_p), lambda i: (i, 0))]      # activation tile
    flat_inputs = [x_p]
    for w, b in padded_params:
        kp, np_ = w.shape
        in_specs.append(pl.BlockSpec((kp, np_), lambda i: (0, 0)))   # resident weight
        in_specs.append(pl.BlockSpec((1, np_), lambda i: (0, 0)))    # resident bias row
        flat_inputs += [w, b]

    # VMEM budget: double-buffered in/out activation tiles + (double-buffered) params.
    bytes_needed = 2 * tm * k0_p * 4 + 2 * tm * n_last * 4
    for w, b in padded_params:
        bytes_needed += 2 * (w.size * w.dtype.itemsize + b.size * b.dtype.itemsize)
    vmem_limit = int(min(max(2 * bytes_needed + (4 << 20), 32 << 20), 64 << 20))

    out = pl.pallas_call(
        _fused_decoder_kernel,
        out_shape=jax.ShapeDtypeStruct((m_p, n_last), jnp.float32),
        grid_spec=pltpu.PrefetchScalarGridSpec(
            num_scalar_prefetch=0,
            grid=(m_p // tm,),
            in_specs=in_specs,
            out_specs=pl.BlockSpec((tm, n_last), lambda i: (i, 0)),  # lane-dense store
        ),
        compiler_params=pltpu.CompilerParams(
            dimension_semantics=("parallel",),
            vmem_limit_bytes=vmem_limit,
        ),
    )(*flat_inputs)

    return out[:M, :output_size]


def _reference_forward(code, params):
    x = code
    for w, b in params:
        x = jnp.maximum(x @ w + b, 0.0)
    return x


if __name__ == "__main__":
    # Small shapes consistent with the module's forward: code is (batch, code_size).
    batch = 19            # deliberately not a multiple of 8 to exercise row padding
    code_size = 32
    hidden_sizes = [64, 48]
    output_size = 24

    key = jax.random.PRNGKey(0)
    key, kx = jax.random.split(key)
    code = jax.random.normal(kx, (batch, code_size), jnp.float32)

    params = init_decoder_params(key, code_size, output_size, hidden_sizes)
    ref = _reference_forward(code, params)

    # f32 compute path (matches the reference tightly).
    pp_f32 = prepare_decoder_params(params, jnp.float32)
    out = jax.block_until_ready(decoder_forward(code, pp_f32, output_size=output_size))
    assert out.shape == (batch, output_size)
    assert jnp.allclose(out, ref, atol=1e-5, rtol=1e-5)

    # bf16 weights/activations for the v6e/v7x MXU (f32 accumulation) — looser tolerance.
    pp_bf16 = prepare_decoder_params(params, jnp.bfloat16)
    out_bf16 = jax.block_until_ready(
        decoder_forward(code, pp_bf16, output_size=output_size))
    assert out_bf16.shape == (batch, output_size)
    assert jnp.allclose(out_bf16, ref, atol=5e-2, rtol=5e-2)

    print("KERNEL_OK")
</pallas_src>

<mosaic_0001>
module attributes {stable_mosaic.version = 11 : i64} {
  func.func @_fused_decoder_kernel(%arg0: i32, %arg1: memref<24x128xf32, #tpu.memory_space<vmem>>, %arg2: memref<128x128xf32, #tpu.memory_space<vmem>>, %arg3: memref<1x128xf32, #tpu.memory_space<vmem>>, %arg4: memref<128x128xf32, #tpu.memory_space<vmem>>, %arg5: memref<1x128xf32, #tpu.memory_space<vmem>>, %arg6: memref<128x128xf32, #tpu.memory_space<vmem>>, %arg7: memref<1x128xf32, #tpu.memory_space<vmem>>, %arg8: memref<24x128xf32, #tpu.memory_space<vmem>>) attributes {dimension_semantics = [#tpu.dimension_semantics<parallel>], iteration_bounds = array<i64: 1>, scalar_prefetch = 0 : i64, scratch_operands = 0 : i64, tpu.core_type = #tpu.core_type<tc>, window_params = [{transform_indices = @transform_0, window_bounds = array<i64: 24, 128>}, {pipeline_mode = #tpu.pipeline_mode<synchronous>, transform_indices = @transform_1, window_bounds = array<i64: 128, 128>}, {pipeline_mode = #tpu.pipeline_mode<synchronous>, transform_indices = @transform_2, window_bounds = array<i64: 1, 128>}, {pipeline_mode = #tpu.pipeline_mode<synchronous>, transform_indices = @transform_3, window_bounds = array<i64: 128, 128>}, {pipeline_mode = #tpu.pipeline_mode<synchronous>, transform_indices = @transform_4, window_bounds = array<i64: 1, 128>}, {pipeline_mode = #tpu.pipeline_mode<synchronous>, transform_indices = @transform_5, window_bounds = array<i64: 128, 128>}, {pipeline_mode = #tpu.pipeline_mode<synchronous>, transform_indices = @transform_6, window_bounds = array<i64: 1, 128>}, {transform_indices = @transform_7, window_bounds = array<i64: 24, 128>}]} {
    %c0 = arith.constant 0 : index
    %c0_0 = arith.constant 0 : index
    %0 = vector.load %arg1[%c0, %c0_0] : memref<24x128xf32, #tpu.memory_space<vmem>>, vector<24x128xf32>
    %c0_1 = arith.constant 0 : index
    %c0_2 = arith.constant 0 : index
    %1 = vector.load %arg2[%c0_1, %c0_2] : memref<128x128xf32, #tpu.memory_space<vmem>>, vector<128x128xf32>
    %c0_3 = arith.constant 0 : index
    %c0_4 = arith.constant 0 : index
    %2 = vector.load %arg3[%c0_3, %c0_4] : memref<1x128xf32, #tpu.memory_space<vmem>>, vector<1x128xf32>
    %cst = arith.constant dense<0.000000e+00> : vector<24x128xf32>
    %3 = tpu.matmul %0, %1, %cst {dimension_numbers = #tpu.dot_dimension_numbers<[1], [0], [0], [1], [0, 0, 1, 1], [], []>} : vector<24x128xf32>, vector<128x128xf32>, vector<24x128xf32> -> vector<24x128xf32>
    %4 = vector.broadcast %2 : vector<1x128xf32> to vector<24x128xf32>
    %5 = arith.addf %3, %4 : vector<24x128xf32>
    %cst_5 = arith.constant 0.000000e+00 : f32
    %6 = vector.broadcast %cst_5 : f32 to vector<24x128xf32>
    %7 = arith.maximumf %5, %6 : vector<24x128xf32>
    %c0_6 = arith.constant 0 : index
    %c0_7 = arith.constant 0 : index
    %8 = vector.load %arg4[%c0_6, %c0_7] : memref<128x128xf32, #tpu.memory_space<vmem>>, vector<128x128xf32>
    %c0_8 = arith.constant 0 : index
    %c0_9 = arith.constant 0 : index
    %9 = vector.load %arg5[%c0_8, %c0_9] : memref<1x128xf32, #tpu.memory_space<vmem>>, vector<1x128xf32>
    %cst_10 = arith.constant dense<0.000000e+00> : vector<24x128xf32>
    %10 = tpu.matmul %7, %8, %cst_10 {dimension_numbers = #tpu.dot_dimension_numbers<[1], [0], [0], [1], [0, 0, 1, 1], [], []>} : vector<24x128xf32>, vector<128x128xf32>, vector<24x128xf32> -> vector<24x128xf32>
    %11 = vector.broadcast %9 : vector<1x128xf32> to vector<24x128xf32>
    %12 = arith.addf %10, %11 : vector<24x128xf32>
    %cst_11 = arith.constant 0.000000e+00 : f32
    %13 = vector.broadcast %cst_11 : f32 to vector<24x128xf32>
    %14 = arith.maximumf %12, %13 : vector<24x128xf32>
    %c0_12 = arith.constant 0 : index
    %c0_13 = arith.constant 0 : index
    %15 = vector.load %arg6[%c0_12, %c0_13] : memref<128x128xf32, #tpu.memory_space<vmem>>, vector<128x128xf32>
    %c0_14 = arith.constant 0 : index
    %c0_15 = arith.constant 0 : index
    %16 = vector.load %arg7[%c0_14, %c0_15] : memref<1x128xf32, #tpu.memory_space<vmem>>, vector<1x128xf32>
    %cst_16 = arith.constant dense<0.000000e+00> : vector<24x128xf32>
    %17 = tpu.matmul %14, %15, %cst_16 {dimension_numbers = #tpu.dot_dimension_numbers<[1], [0], [0], [1], [0, 0, 1, 1], [], []>} : vector<24x128xf32>, vector<128x128xf32>, vector<24x128xf32> -> vector<24x128xf32>
    %18 = vector.broadcast %16 : vector<1x128xf32> to vector<24x128xf32>
    %19 = arith.addf %17, %18 : vector<24x128xf32>
    %cst_17 = arith.constant 0.000000e+00 : f32
    %20 = vector.broadcast %cst_17 : f32 to vector<24x128xf32>
    %21 = arith.maximumf %19, %20 : vector<24x128xf32>
    %c0_18 = arith.constant 0 : index
    %c0_19 = arith.constant 0 : index
    %22 = vector.load %arg8[%c0_18, %c0_19] : memref<24x128xf32, #tpu.memory_space<vmem>>, vector<24x128xf32>
    tpu.vector_store %arg8[%c0_18, %c0_19], %21 {strides = array<i32>} : memref<24x128xf32, #tpu.memory_space<vmem>>, vector<24x128xf32>,
    return
  }
  func.func @transform_0(%arg0: i32) -> (i32, i32) {
    %c0_i32 = arith.constant 0 : i32
    %c0_i32_0 = arith.constant 0 : i32
    return %arg0, %c0_i32 : i32, i32
  }
  func.func @transform_1(%arg0: i32) -> (i32, i32) {
    %c0_i32 = arith.constant 0 : i32
    %c0_i32_0 = arith.constant 0 : i32
    %c0_i32_1 = arith.constant 0 : i32
    return %c0_i32, %c0_i32_0 : i32, i32
  }
  func.func @transform_2(%arg0: i32) -> (i32, i32) {
    %c0_i32 = arith.constant 0 : i32
    %c0_i32_0 = arith.constant 0 : i32
    %c0_i32_1 = arith.constant 0 : i32
    return %c0_i32, %c0_i32_0 : i32, i32
  }
  func.func @transform_3(%arg0: i32) -> (i32, i32) {
    %c0_i32 = arith.constant 0 : i32
    %c0_i32_0 = arith.constant 0 : i32
    %c0_i32_1 = arith.constant 0 : i32
    return %c0_i32, %c0_i32_0 : i32, i32
  }
  func.func @transform_4(%arg0: i32) -> (i32, i32) {
    %c0_i32 = arith.constant 0 : i32
    %c0_i32_0 = arith.constant 0 : i32
    %c0_i32_1 = arith.constant 0 : i32
    return %c0_i32, %c0_i32_0 : i32, i32
  }
  func.func @transform_5(%arg0: i32) -> (i32, i32) {
    %c0_i32 = arith.constant 0 : i32
    %c0_i32_0 = arith.constant 0 : i32
    %c0_i32_1 = arith.constant 0 : i32
    return %c0_i32, %c0_i32_0 : i32, i32
  }
  func.func @transform_6(%arg0: i32) -> (i32, i32) {
    %c0_i32 = arith.constant 0 : i32
    %c0_i32_0 = arith.constant 0 : i32
    %c0_i32_1 = arith.constant 0 : i32
    return %c0_i32, %c0_i32_0 : i32, i32
  }
  func.func @transform_7(%arg0: i32) -> (i32, i32) {
    %c0_i32 = arith.constant 0 : i32
    %c0_i32_0 = arith.constant 0 : i32
    return %arg0, %c0_i32 : i32, i32
  }
}

</mosaic_0001>

<llo_original>
// kernel: decoder_forward.1
$region0: #{decoder_forward.1}
  #allocation0 [shape = 'u32[]', space=smem, size = 0x4, offset = 0x4, fixed_abs, tag = 'smem constant byte address 0x4 - core index']
  #allocation1 [shape = 'u32[144,128]{1,0:T(1,128)}', space=vmem, size = 0x12000, scoped, tag = 'internal scratch']
  %s0 = inlined_call_operand.vmem [shape: f32[24,128], index: 0, kind: input, shape index: {}]
  %s1 = inlined_call_operand.hbm [shape: f32[128,128], index: 1, kind: input, shape index: {}]
  %s2 = inlined_call_operand.vmem [shape: f32[1,128], index: 2, kind: input, shape index: {}]
  %s3 = inlined_call_operand.hbm [shape: f32[128,128], index: 3, kind: input, shape index: {}]
  %s4 = inlined_call_operand.vmem [shape: f32[1,128], index: 4, kind: input, shape index: {}]
  %s5 = inlined_call_operand.hbm [shape: f32[128,128], index: 5, kind: input, shape index: {}]
  %s6 = inlined_call_operand.vmem [shape: f32[1,128], index: 6, kind: input, shape index: {}]
  %s7 = inlined_call_operand.hbm [shape: f32[24,128], index: 7, kind: output, shape index: {}]
  %s8 = sld [smem:[#allocation0]]
  $region50: #{decoder_forward.1} parent=0
    _
  %s10 = ssub.s32 1, %s8
  %s11 = scalar_select 0, %s10, %s8
  $region1: #{decoder_forward.1} parent=0
    #allocation2 [shape = 'u8[65536]{0}', space=vmem, size = 0x10000, scoped, tag = 'input window, operand 1, single buffered']
    #allocation3 [shape = 's32[1]{0}', space=sflag, size = 0x4, scoped, tag = 'scoped memory for decoder_forward.1']
    #allocation4 [shape = 's32[1]{0}', space=sflag, size = 0x4, scoped, tag = 'scoped memory for decoder_forward.1']
    #allocation5 [shape = 'u8[65536]{0}', space=vmem, size = 0x10000, scoped, tag = 'input window, operand 3, single buffered']
    #allocation6 [shape = 's32[1]{0}', space=sflag, size = 0x4, scoped, tag = 'scoped memory for decoder_forward.1']
    #allocation7 [shape = 'u8[65536]{0}', space=vmem, size = 0x10000, scoped, tag = 'input window, operand 5, single buffered']
    #allocation8 [shape = 'u8[12288]{0}', space=vmem, size = 0x3000, scoped, tag = 'output window, operand 0, single buffered']
    %12 = vsyncpa [#allocation3], 0
    %13 = vsyncpa [#allocation6], 0
    %14 = vsyncpa [#allocation4], 0
    // Predicated region
    $region2: #{decoder_forward.1} parent=1 // pred_check
      _
    $region3: #{decoder_forward.1} parent=1 // pred_check_branch
      %16 = sbr.rel (0) target = $region5
    $region4: #{decoder_forward.1} parent=1 // pred_region
      _
    $region5: #{decoder_forward.1} parent=1 // pred_fallthru
      _
    // Predicated region
    $region6: #{decoder_forward.1} parent=1 // pred_check
      _
    $region7: #{decoder_forward.1} parent=1 // pred_check_branch
      %18 = sbr.rel (0) target = $region9
    $region8: #{decoder_forward.1} parent=1 // pred_region
      %s20 = ssub.s32 2048, 2048
      %21 = vsyncadd [#allocation3], %s20
      %s22 = sshll.u32 [#allocation2], 4
      %s23 = int_to_ptr.vmem [resolvable:$true] %s22
      %28 = dma.hbm_to_vmem [thread:$0]  %s1, 2048, %s23, [#allocation3], 128, 128, 8
    $region9: #{decoder_forward.1} parent=1 // pred_fallthru
      _
    // Predicated region
    $region10: #{decoder_forward.1} parent=1 // pred_check
      _
    $region11: #{decoder_forward.1} parent=1 // pred_check_branch
      %30 = sbr.rel (0) target = $region13
    $region12: #{decoder_forward.1} parent=1 // pred_region
      _
    $region13: #{decoder_forward.1} parent=1 // pred_fallthru
      _
    // Predicated region
    $region14: #{decoder_forward.1} parent=1 // pred_check
      _
    $region15: #{decoder_forward.1} parent=1 // pred_check_branch
      %32 = sbr.rel (0) target = $region17
    $region16: #{decoder_forward.1} parent=1 // pred_region
      %s34 = ssub.s32 2048, 2048
      %35 = vsyncadd [#allocation6], %s34
      %s36 = sshll.u32 [#allocation5], 4
      %s37 = int_to_ptr.vmem [resolvable:$true] %s36
      %42 = dma.hbm_to_vmem [thread:$0]  %s3, 2048, %s37, [#allocation6], 128, 128, 8
    $region17: #{decoder_forward.1} parent=1 // pred_fallthru
      _
    // Predicated region
    $region18: #{decoder_forward.1} parent=1 // pred_check
      _
    $region19: #{decoder_forward.1} parent=1 // pred_check_branch
      %44 = sbr.rel (0) target = $region21
    $region20: #{decoder_forward.1} parent=1 // pred_region
      _
    $region21: #{decoder_forward.1} parent=1 // pred_fallthru
      _
    // Predicated region
    $region22: #{decoder_forward.1} parent=1 // pred_check
      _
    $region23: #{decoder_forward.1} parent=1 // pred_check_branch
      %46 = sbr.rel (0) target = $region25
    $region24: #{decoder_forward.1} parent=1 // pred_region
      %s48 = ssub.s32 2048, 2048
      %49 = vsyncadd [#allocation6], %s48
      %s50 = sshll.u32 [#allocation7], 4
      %s51 = int_to_ptr.vmem [resolvable:$true] %s50
      %56 = dma.hbm_to_vmem [thread:$0]  %s5, 2048, %s51, [#allocation6], 128, 128, 8
    $region25: #{decoder_forward.1} parent=1 // pred_fallthru
      _
    // Predicated region
    $region26: #{decoder_forward.1} parent=1 // pred_check
      _
    $region27: #{decoder_forward.1} parent=1 // pred_check_branch
      %58 = sbr.rel (0) target = $region29
    $region28: #{decoder_forward.1} parent=1 // pred_region
      _
    $region29: #{decoder_forward.1} parent=1 // pred_fallthru
      _
    // Predicated region
    $region30: #{decoder_forward.1} parent=1 // pred_check
      _
    $region31: #{decoder_forward.1} parent=1 // pred_check_branch
      %60 = sbr.rel (0) target = $region33
    $region32: #{decoder_forward.1} parent=1 // pred_region
      %61 = dma.done [#allocation3], 2048
    $region33: #{decoder_forward.1} parent=1 // pred_fallthru
      _
    // Predicated region
    $region34: #{decoder_forward.1} parent=1 // pred_check
      _
    $region35: #{decoder_forward.1} parent=1 // pred_check_branch
      %63 = sbr.rel (0) target = $region37
    $region36: #{decoder_forward.1} parent=1 // pred_region
      %64 = dma.done [#allocation6], 2048
    $region37: #{decoder_forward.1} parent=1 // pred_fallthru
      _
    // Predicated region
    $region38: #{decoder_forward.1} parent=1 // pred_check
      _
    $region39: #{decoder_forward.1} parent=1 // pred_check_branch
      %66 = sbr.rel (0) target = $region41
    $region40: #{decoder_forward.1} parent=1 // pred_region
      %67 = dma.done [#allocation6], 2048
    $region41: #{decoder_forward.1} parent=1 // pred_fallthru
      _
    %v68 = vld [vmem:[%s0] sm:$0xff]
    %v69 = vld [vmem:[%s0 + $0x8] sm:$0xff]
    %v70 = vld [vmem:[%s0 + $0x10] sm:$0xff]
    %v71 = vld [vmem:[#allocation2] sm:$0xff]
    %v72 = vld [vmem:[#allocation2 + $0x8] sm:$0xff]
    %v73 = vld [vmem:[#allocation2 + $0x10] sm:$0xff]
    %v74 = vld [vmem:[#allocation2 + $0x18] sm:$0xff]
    %v75 = vld [vmem:[#allocation2 + $0x20] sm:$0xff]
    %v76 = vld [vmem:[#allocation2 + $0x28] sm:$0xff]
    %v77 = vld [vmem:[#allocation2 + $0x30] sm:$0xff]
    %v78 = vld [vmem:[#allocation2 + $0x38] sm:$0xff]
    %v79 = vld [vmem:[#allocation2 + $0x40] sm:$0xff]
    %v80 = vld [vmem:[#allocation2 + $0x48] sm:$0xff]
    %v81 = vld [vmem:[#allocation2 + $0x50] sm:$0xff]
    %v82 = vld [vmem:[#allocation2 + $0x58] sm:$0xff]
    %v83 = vld [vmem:[#allocation2 + $0x60] sm:$0xff]
    %v84 = vld [vmem:[#allocation2 + $0x68] sm:$0xff]
    %v85 = vld [vmem:[#allocation2 + $0x70] sm:$0xff]
    %v86 = vld [vmem:[#allocation2 + $0x78] sm:$0xff]
    %v87 = vld [vmem:[%s2] sm:$0x1]
    %v89 = vlaneseq
    %v90 = vshrl.u32 %v89, 7
    %v91 = vsub.s32 0, %v90
    %v92 = vrot.slane %v87, %v91
    %94 = vmatprep.subr.mxu0 0.0
    %95 = vmatpush1.msra.mxu0 %v71
    %96 = vmatprep.subr.mxu0 0.0
    %97 = vmatpush1.msra.mxu0 %v72
    %98 = vmatprep.subr.mxu0 0.0
    %99 = vmatpush1.msra.mxu0 %v73
    %100 = vmatprep.subr.mxu0 0.0
    %101 = vmatpush1.msra.mxu0 %v74
    %102 = vmatprep.subr.mxu0 0.0
    %103 = vmatpush1.msra.mxu0 %v75
    %104 = vmatprep.subr.mxu0 0.0
    %105 = vmatpush1.msra.mxu0 %v76
    %106 = vmatprep.subr.mxu0 0.0
    %107 = vmatpush1.msra.mxu0 %v77
    %108 = vmatprep.subr.mxu0 0.0
    %109 = vmatpush1.msra.mxu0 %v78
    %110 = vmatprep.subr.mxu0 0.0
    %111 = vmatpush1.msra.mxu0 %v79
    %112 = vmatprep.subr.mxu0 0.0
    %113 = vmatpush1.msra.mxu0 %v80
    %114 = vmatprep.subr.mxu0 0.0
    %115 = vmatpush1.msra.mxu0 %v81
    %116 = vmatprep.subr.mxu0 0.0
    %117 = vmatpush1.msra.mxu0 %v82
    %118 = vmatprep.subr.mxu0 0.0
    %119 = vmatpush1.msra.mxu0 %v83
    %120 = vmatprep.subr.mxu0 0.0
    %121 = vmatpush1.msra.mxu0 %v84
    %122 = vmatprep.subr.mxu0 0.0
    %123 = vmatpush1.msra.mxu0 %v85
    %124 = vmatprep.subr.mxu0 0.0
    %125 = vmatpush1.msra.mxu0 %v86
    %126 = vmatprep.subr.mxu0 0.0
    %127 = vmatpush1.msra.mxu0 0.0
    %128 = vmatprep.subr.mxu0 0.0
    %129 = vmatpush1.msra.mxu0 0.0
    %130 = vmatprep.subr.mxu0 0.0
    %131 = vmatpush1.msra.mxu0 0.0
    %132 = vmatprep.subr.mxu0 0.0
    %133 = vmatpush1.msra.mxu0 0.0
    %134 = vmatprep.subr.mxu0 0.0
    %135 = vmatpush1.msra.mxu0 0.0
    %136 = vmatprep.subr.mxu0 0.0
    %137 = vmatpush1.msra.mxu0 0.0
    %138 = vmatprep.subr.mxu0 0.0
    %139 = vmatpush1.msra.mxu0 0.0
    %140 = vmatprep.subr.mxu0 0.0
    %141 = vmatpush1.msra.mxu0 0.0
    %142 = vmatprep.subr.mxu0 0.0
    %143 = vmatpush1.msra.mxu0 0.0
    %144 = vmatprep.subr.mxu0 0.0
    %145 = vmatpush1.msra.mxu0 0.0
    %146 = vmatprep.subr.mxu0 0.0
    %147 = vmatpush1.msra.mxu0 0.0
    %148 = vmatprep.subr.mxu0 0.0
    %149 = vmatpush1.msra.mxu0 0.0
    %150 = vmatprep.subr.mxu0 0.0
    %151 = vmatpush1.msra.mxu0 0.0
    %152 = vmatprep.subr.mxu0 0.0
    %153 = vmatpush1.msra.mxu0 0.0
    %154 = vmatprep.subr.mxu0 0.0
    %155 = vmatpush1.msra.mxu0 0.0
    %156 = vmatprep.subr.mxu0 0.0
    %157 = vmatpush1.msra.mxu0 0.0
    %158 = vmatprep.mubr.f32.mxu0 0.0
    %159 = vmatmul.mubr.f32.gmra.mrb[0].mxu0 %v68
    %v160 = vpop.f32.mrb[0].mxu0
    %v161 = vadd.f32 %v92, %v160
    %v162 = vpop.f32.mrb[0].mxu0
    %163 = vmatprep.mubr.f32.mxu0 0.0
    %164 = vmatmul.mubr.f32.gmra.mrb[0].mxu0 %v69
    %v165 = vpop.f32.mrb[0].mxu0
    %v166 = vadd.f32 %v92, %v165
    %v167 = vpop.f32.mrb[0].mxu0
    %168 = vmatprep.mubr.f32.mxu0 0.0
    %169 = vmatmul.mubr.f32.gmra.mrb[0].mxu0 %v70
    %v170 = vpop.f32.mrb[0].mxu0
    %v171 = vadd.f32 %v92, %v170
    %v172 = vpop.f32.mrb[0].mxu0
    %173 = vdwg.mxu0
    %v174 = vmax.f32 %v161, 0.0
    %v175 = vmax.f32 %v166, 0.0
    %v176 = vmax.f32 %v171, 0.0
    %v177 = vld [vmem:[#allocation5] sm:$0xff]
    %v178 = vld [vmem:[#allocation5 + $0x8] sm:$0xff]
    %v179 = vld [vmem:[#allocation5 + $0x10] sm:$0xff]
    %v180 = vld [vmem:[#allocation5 + $0x18] sm:$0xff]
    %v181 = vld [vmem:[#allocation5 + $0x20] sm:$0xff]
    %v182 = vld [vmem:[#allocation5 + $0x28] sm:$0xff]
    %v183 = vld [vmem:[#allocation5 + $0x30] sm:$0xff]
    %v184 = vld [vmem:[#allocation5 + $0x38] sm:$0xff]
    %v185 = vld [vmem:[#allocation5 + $0x40] sm:$0xff]
    %v186 = vld [vmem:[#allocation5 + $0x48] sm:$0xff]
    %v187 = vld [vmem:[#allocation5 + $0x50] sm:$0xff]
    %v188 = vld [vmem:[#allocation5 + $0x58] sm:$0xff]
    %v189 = vld [vmem:[#allocation5 + $0x60] sm:$0xff]
    %v190 = vld [vmem:[#allocation5 + $0x68] sm:$0xff]
    %v191 = vld [vmem:[#allocation5 + $0x70] sm:$0xff]
    %v192 = vld [vmem:[#allocation5 + $0x78] sm:$0xff]
    %v193 = vld [vmem:[%s4] sm:$0x1]
    %v195 = vlaneseq
    %v196 = vshrl.u32 %v195, 7
    %v197 = vsub.s32 0, %v196
    %v198 = vrot.slane %v193, %v197
    %200 = vmatprep.subr.mxu0 0.0
    %201 = vmatpush1.msra.mxu0 %v177
    %202 = vmatprep.subr.mxu0 0.0
    %203 = vmatpush1.msra.mxu0 %v178
    %204 = vmatprep.subr.mxu0 0.0
    %205 = vmatpush1.msra.mxu0 %v179
    %206 = vmatprep.subr.mxu0 0.0
    %207 = vmatpush1.msra.mxu0 %v180
    %208 = vmatprep.subr.mxu0 0.0
    %209 = vmatpush1.msra.mxu0 %v181
    %210 = vmatprep.subr.mxu0 0.0
    %211 = vmatpush1.msra.mxu0 %v182
    %212 = vmatprep.subr.mxu0 0.0
    %213 = vmatpush1.msra.mxu0 %v183
    %214 = vmatprep.subr.mxu0 0.0
    %215 = vmatpush1.msra.mxu0 %v184
    %216 = vmatprep.subr.mxu0 0.0
    %217 = vmatpush1.msra.mxu0 %v185
    %218 = vmatprep.subr.mxu0 0.0
    %219 = vmatpush1.msra.mxu0 %v186
    %220 = vmatprep.subr.mxu0 0.0
    %221 = vmatpush1.msra.mxu0 %v187
    %222 = vmatprep.subr.mxu0 0.0
    %223 = vmatpush1.msra.mxu0 %v188
    %224 = vmatprep.subr.mxu0 0.0
    %225 = vmatpush1.msra.mxu0 %v189
    %226 = vmatprep.subr.mxu0 0.0
    %227 = vmatpush1.msra.mxu0 %v190
    %228 = vmatprep.subr.mxu0 0.0
    %229 = vmatpush1.msra.mxu0 %v191
    %230 = vmatprep.subr.mxu0 0.0
    %231 = vmatpush1.msra.mxu0 %v192
    %232 = vmatprep.subr.mxu0 0.0
    %233 = vmatpush1.msra.mxu0 0.0
    %234 = vmatprep.subr.mxu0 0.0
    %235 = vmatpush1.msra.mxu0 0.0
    %236 = vmatprep.subr.mxu0 0.0
    %237 = vmatpush1.msra.mxu0 0.0
    %238 = vmatprep.subr.mxu0 0.0
    %239 = vmatpush1.msra.mxu0 0.0
    %240 = vmatprep.subr.mxu0 0.0
    %241 = vmatpush1.msra.mxu0 0.0
    %242 = vmatprep.subr.mxu0 0.0
    %243 = vmatpush1.msra.mxu0 0.0
    %244 = vmatprep.subr.mxu0 0.0
    %245 = vmatpush1.msra.mxu0 0.0
    %246 = vmatprep.subr.mxu0 0.0
    %247 = vmatpush1.msra.mxu0 0.0
    %248 = vmatprep.subr.mxu0 0.0
    %249 = vmatpush1.msra.mxu0 0.0
    %250 = vmatprep.subr.mxu0 0.0
    %251 = vmatpush1.msra.mxu0 0.0
    %252 = vmatprep.subr.mxu0 0.0
    %253 = vmatpush1.msra.mxu0 0.0
    %254 = vmatprep.subr.mxu0 0.0
    %255 = vmatpush1.msra.mxu0 0.0
    %256 = vmatprep.subr.mxu0 0.0
    %257 = vmatpush1.msra.mxu0 0.0
    %258 = vmatprep.subr.mxu0 0.0
    %259 = vmatpush1.msra.mxu0 0.0
    %260 = vmatprep.subr.mxu0 0.0
    %261 = vmatpush1.msra.mxu0 0.0
    %262 = vmatprep.subr.mxu0 0.0
    %263 = vmatpush1.msra.mxu0 0.0
    %264 = vmatprep.mubr.f32.mxu0 0.0
    %265 = vmatmul.mubr.f32.gmra.mrb[0].mxu0 %v174
    %v266 = vpop.f32.mrb[0].mxu0
    %v267 = vadd.f32 %v198, %v266
    %v268 = vpop.f32.mrb[0].mxu0
    %269 = vmatprep.mubr.f32.mxu0 0.0
    %270 = vmatmul.mubr.f32.gmra.mrb[0].mxu0 %v175
    %v271 = vpop.f32.mrb[0].mxu0
    %v272 = vadd.f32 %v198, %v271
    %v273 = vpop.f32.mrb[0].mxu0
    %274 = vmatprep.mubr.f32.mxu0 0.0
    %275 = vmatmul.mubr.f32.gmra.mrb[0].mxu0 %v176
    %v276 = vpop.f32.mrb[0].mxu0
    %v277 = vadd.f32 %v198, %v276
    %v278 = vpop.f32.mrb[0].mxu0
    %279 = vdwg.mxu0
    %v280 = vmax.f32 %v267, 0.0
    %v281 = vmax.f32 %v272, 0.0
    %v282 = vmax.f32 %v277, 0.0
    %v283 = vld [vmem:[#allocation7] sm:$0xff]
    %v284 = vld [vmem:[#allocation7 + $0x8] sm:$0xff]
    %v285 = vld [vmem:[#allocation7 + $0x10] sm:$0xff]
    %v286 = vld [vmem:[#allocation7 + $0x18] sm:$0xff]
    %v287 = vld [vmem:[#allocation7 + $0x20] sm:$0xff]
    %v288 = vld [vmem:[#allocation7 + $0x28] sm:$0xff]
    %v289 = vld [vmem:[#allocation7 + $0x30] sm:$0xff]
    %v290 = vld [vmem:[#allocation7 + $0x38] sm:$0xff]
    %v291 = vld [vmem:[#allocation7 + $0x40] sm:$0xff]
    %v292 = vld [vmem:[#allocation7 + $0x48] sm:$0xff]
    %v293 = vld [vmem:[#allocation7 + $0x50] sm:$0xff]
    %v294 = vld [vmem:[#allocation7 + $0x58] sm:$0xff]
    %v295 = vld [vmem:[#allocation7 + $0x60] sm:$0xff]
    %v296 = vld [vmem:[#allocation7 + $0x68] sm:$0xff]
    %v297 = vld [vmem:[#allocation7 + $0x70] sm:$0xff]
    %v298 = vld [vmem:[#allocation7 + $0x78] sm:$0xff]
    %v299 = vld [vmem:[%s6] sm:$0x1]
    %v301 = vlaneseq
    %v302 = vshrl.u32 %v301, 7
    %v303 = vsub.s32 0, %v302
    %v304 = vrot.slane %v299, %v303
    %306 = vmatprep.subr.mxu0 0.0
    %307 = vmatpush1.msra.mxu0 %v283
    %308 = vmatprep.subr.mxu0 0.0
    %309 = vmatpush1.msra.mxu0 %v284
    %310 = vmatprep.subr.mxu0 0.0
    %311 = vmatpush1.msra.mxu0 %v285
    %312 = vmatprep.subr.mxu0 0.0
    %313 = vmatpush1.msra.mxu0 %v286
    %314 = vmatprep.subr.mxu0 0.0
    %315 = vmatpush1.msra.mxu0 %v287
    %316 = vmatprep.subr.mxu0 0.0
    %317 = vmatpush1.msra.mxu0 %v288
    %318 = vmatprep.subr.mxu0 0.0
    %319 = vmatpush1.msra.mxu0 %v289
    %320 = vmatprep.subr.mxu0 0.0
    %321 = vmatpush1.msra.mxu0 %v290
    %322 = vmatprep.subr.mxu0 0.0
    %323 = vmatpush1.msra.mxu0 %v291
    %324 = vmatprep.subr.mxu0 0.0
    %325 = vmatpush1.msra.mxu0 %v292
    %326 = vmatprep.subr.mxu0 0.0
    %327 = vmatpush1.msra.mxu0 %v293
    %328 = vmatprep.subr.mxu0 0.0
    %329 = vmatpush1.msra.mxu0 %v294
    %330 = vmatprep.subr.mxu0 0.0
    %331 = vmatpush1.msra.mxu0 %v295
    %332 = vmatprep.subr.mxu0 0.0
    %333 = vmatpush1.msra.mxu0 %v296
    %334 = vmatprep.subr.mxu0 0.0
    %335 = vmatpush1.msra.mxu0 %v297
    %336 = vmatprep.subr.mxu0 0.0
    %337 = vmatpush1.msra.mxu0 %v298
    %338 = vmatprep.subr.mxu0 0.0
    %339 = vmatpush1.msra.mxu0 0.0
    %340 = vmatprep.subr.mxu0 0.0
    %341 = vmatpush1.msra.mxu0 0.0
    %342 = vmatprep.subr.mxu0 0.0
    %343 = vmatpush1.msra.mxu0 0.0
    %344 = vmatprep.subr.mxu0 0.0
    %345 = vmatpush1.msra.mxu0 0.0
    %346 = vmatprep.subr.mxu0 0.0
    %347 = vmatpush1.msra.mxu0 0.0
    %348 = vmatprep.subr.mxu0 0.0
    %349 = vmatpush1.msra.mxu0 0.0
    %350 = vmatprep.subr.mxu0 0.0
    %351 = vmatpush1.msra.mxu0 0.0
    %352 = vmatprep.subr.mxu0 0.0
    %353 = vmatpush1.msra.mxu0 0.0
    %354 = vmatprep.subr.mxu0 0.0
    %355 = vmatpush1.msra.mxu0 0.0
    %356 = vmatprep.subr.mxu0 0.0
    %357 = vmatpush1.msra.mxu0 0.0
    %358 = vmatprep.subr.mxu0 0.0
    %359 = vmatpush1.msra.mxu0 0.0
    %360 = vmatprep.subr.mxu0 0.0
    %361 = vmatpush1.msra.mxu0 0.0
    %362 = vmatprep.subr.mxu0 0.0
    %363 = vmatpush1.msra.mxu0 0.0
    %364 = vmatprep.subr.mxu0 0.0
    %365 = vmatpush1.msra.mxu0 0.0
    %366 = vmatprep.subr.mxu0 0.0
    %367 = vmatpush1.msra.mxu0 0.0
    %368 = vmatprep.subr.mxu0 0.0
    %369 = vmatpush1.msra.mxu0 0.0
    %370 = vmatprep.mubr.f32.mxu0 0.0
    %371 = vmatmul.mubr.f32.gmra.mrb[0].mxu0 %v280
    %v372 = vpop.f32.mrb[0].mxu0
    %v373 = vadd.f32 %v304, %v372
    %v374 = vpop.f32.mrb[0].mxu0
    %375 = vmatprep.mubr.f32.mxu0 0.0
    %376 = vmatmul.mubr.f32.gmra.mrb[0].mxu0 %v281
    %v377 = vpop.f32.mrb[0].mxu0
    %v378 = vadd.f32 %v304, %v377
    %v379 = vpop.f32.mrb[0].mxu0
    %380 = vmatprep.mubr.f32.mxu0 0.0
    %381 = vmatmul.mubr.f32.gmra.mrb[0].mxu0 %v282
    %v382 = vpop.f32.mrb[0].mxu0
    %v383 = vadd.f32 %v304, %v382
    %v384 = vpop.f32.mrb[0].mxu0
    %385 = vdwg.mxu0
    %v386 = vmax.f32 %v373, 0.0
    %v387 = vmax.f32 %v378, 0.0
    %v388 = vmax.f32 %v383, 0.0
    %389 = vst [vmem:[#allocation8] sm:$0xff] %v386
    %390 = vst [vmem:[#allocation8 + $0x8] sm:$0xff] %v387
    %391 = vst [vmem:[#allocation8 + $0x10] sm:$0xff] %v388
    // Predicated region
    $region42: #{decoder_forward.1} parent=1 // pred_check
      _
    $region43: #{decoder_forward.1} parent=1 // pred_check_branch
      %393 = sbr.rel (0) target = $region45
    $region44: #{decoder_forward.1} parent=1 // pred_region
      %s395 = ssub.s32 384, 384
      %396 = vsyncadd [#allocation4], %s395
      %s397 = sshll.u32 [#allocation8], 4
      %s398 = int_to_ptr.vmem [resolvable:$true] %s397
      %403 = dma.vmem_to_hbm [thread:$0]  %s398, 384, %s7, [#allocation4], 128, 128, 8
    $region45: #{decoder_forward.1} parent=1 // pred_fallthru
      _
    // Predicated region
    $region46: #{decoder_forward.1} parent=1 // pred_check
      _
    $region47: #{decoder_forward.1} parent=1 // pred_check_branch
      %405 = sbr.rel (0) target = $region49
    $region48: #{decoder_forward.1} parent=1 // pred_region
      %406 = dma.done [#allocation4], 384
    $region49: #{decoder_forward.1} parent=1 // pred_fallthru
      _
    %407 = vsyncpa [#allocation3], 1
    %408 = vsyncpa [#allocation6], 1
    %409 = vsyncpa [#allocation4], 1

</llo_original>
